<compile_context>
chip_gen: v7x
topology: tpu7x:2x2x1
jax: 0.10.0
libtpu: 0.0.40
codegen_flags: <defaults>
</compile_context>

<pallas_src>
import functools

import jax
import jax.numpy as jnp
from jax.experimental import pallas as pl
from jax.experimental.pallas import tpu as pltpu

LANE = 128  # TPU lane width: padded feature dims (hidden/output) are multiples of 128.


def _round_up(n: int, m: int) -> int:
    return ((n + m - 1) // m) * m


def _num_parallel_cores() -> int:
    """Best-effort: 2 on v7x (two TensorCores per chip), else 1. Never raises."""
    try:
        kind = jax.devices()[0].device_kind.lower()
        return 2 if ("v7" in kind or "7x" in kind) else 1
    except Exception:
        return 1


def dqn_mlp_kernel(x_ref, w1_ref, b1_ref, w2_ref, b2_ref, w3_ref, b3_ref, out_ref):
    """Fused 3-layer MLP on one batch tile, all-f32 (matches the torch module)."""
    x = x_ref[...]                                                        # (TB, IN)
    h1 = jnp.dot(x, w1_ref[...], preferred_element_type=jnp.float32) + b1_ref[...]
    h1 = jnp.maximum(h1, 0.0)                                             # (TB, H_P)
    h2 = jnp.dot(h1, w2_ref[...], preferred_element_type=jnp.float32) + b2_ref[...]
    h2 = jnp.maximum(h2, 0.0)                                             # (TB, H_P)
    out_ref[...] = (
        jnp.dot(h2, w3_ref[...], preferred_element_type=jnp.float32) + b3_ref[...]
    )                                                                     # (TB, OUT_P)


def prepare_params(w1, b1, w2, b2, w3, b3):
    """One-time (init-time) zero-padding of hidden/output dims to 128 lanes.

    Weights are stored as (in_features, out_features) (transposed vs torch) and biases as
    (1, out_features), so x @ W + b equals torch's x @ W.T + b exactly. Zero padding is exact
    through matmul / bias-add / ReLU. The input feature dim of w1 is intentionally NOT padded.
    """
    in_dim, hid_dim = w1.shape
    out_dim = w3.shape[1]
    h_p = _round_up(hid_dim, LANE)
    out_p = _round_up(out_dim, LANE)

    def pad2(a, rows, cols):
        return jnp.pad(
            a, ((0, rows - a.shape[0]), (0, cols - a.shape[1]))
        ).astype(jnp.float32)

    padded = (
        pad2(w1, in_dim, h_p),
        pad2(b1, 1, h_p),
        pad2(w2, h_p, h_p),
        pad2(b2, 1, h_p),
        pad2(w3, h_p, out_p),
        pad2(b3, 1, out_p),
    )
    return padded, out_dim


def _choose_batch_tiling(batch, num_batch_tiles, max_tile):
    """Pad batch to a multiple of 8, then pick tile size / count (bounded tail waste)."""
    batch8 = _round_up(batch, 8)
    if num_batch_tiles is None:
        n = max(_num_parallel_cores(), pl.cdiv(batch8, max_tile))
    else:
        n = int(num_batch_tiles)
    n = max(1, min(n, batch8 // 8))          # never shrink a tile below 8 rows
    tb = _round_up(pl.cdiv(batch8, n), 8)
    n = pl.cdiv(batch8, tb)                  # actual tile count after rounding
    return tb, n, tb * n


def dqn_forward(x, padded_params, out_dim, *, num_batch_tiles=None, max_tile=1024):
    """Equivalent of DQNNetwork.forward. x: (batch, input_dim) f32; params from prepare_params."""
    w1_p, b1_p, w2_p, b2_p, w3_p, b3_p = padded_params
    batch, in_dim = x.shape
    h_p = w1_p.shape[1]
    out_p = w3_p.shape[1]

    tb, num_tiles, batch_p = _choose_batch_tiling(batch, num_batch_tiles, max_tile)
    x_p = x if batch_p == batch else jnp.pad(x, ((0, batch_p - batch), (0, 0)))

    flops = 2 * batch_p * (in_dim * h_p + h_p * h_p + h_p * out_p)
    bytes_accessed = 4 * (
        batch_p * in_dim                              # x (f32, unpadded features)
        + in_dim * h_p + h_p * h_p + h_p * out_p      # weights (f32, resident)
        + 2 * h_p + out_p                             # biases
        + batch_p * out_p                             # output (lane-dense 128)
    )

    out_full = pl.pallas_call(
        dqn_mlp_kernel,
        out_shape=jax.ShapeDtypeStruct((batch_p, out_p), jnp.float32),
        grid=(num_tiles,),
        in_specs=[
            pl.BlockSpec((tb, in_dim), lambda i: (i, 0)),   # x: tiled/pipelined over batch
            pl.BlockSpec((in_dim, h_p), lambda i: (0, 0)),  # weights/biases: VMEM-resident
            pl.BlockSpec((1, h_p), lambda i: (0, 0)),
            pl.BlockSpec((h_p, h_p), lambda i: (0, 0)),
            pl.BlockSpec((1, h_p), lambda i: (0, 0)),
            pl.BlockSpec((h_p, out_p), lambda i: (0, 0)),
            pl.BlockSpec((1, out_p), lambda i: (0, 0)),
        ],
        out_specs=pl.BlockSpec((tb, out_p), lambda i: (i, 0)),
        compiler_params=pltpu.CompilerParams(
            dimension_semantics=("parallel",),  # shards batch tiles across TCs on v7x
        ),
        cost_estimate=pl.CostEstimate(
            flops=flops, transcendentals=0, bytes_accessed=bytes_accessed
        ),
    )(x_p, w1_p, b1_p, w2_p, b2_p, w3_p, b3_p)

    # TODO(synk): optionally fuse the downstream argmax over actions into the kernel tail
    # (with padded-lane masking) to shrink the output HBM stream for very large batches.
    return out_full[:batch, :out_dim]


def init_params(key, input_dim, output_dim, hidden_dim=64):
    """Mimics torch.nn.Linear init: U(-1/sqrt(fan_in), 1/sqrt(fan_in)); weights in (in, out) layout."""
    ks = jax.random.split(key, 6)

    def linear(kw, kb, fan_in, fan_out):
        bound = 1.0 / float(fan_in) ** 0.5
        w = jax.random.uniform(kw, (fan_in, fan_out), jnp.float32, -bound, bound)
        b = jax.random.uniform(kb, (1, fan_out), jnp.float32, -bound, bound)
        return w, b

    w1, b1 = linear(ks[0], ks[1], input_dim, hidden_dim)
    w2, b2 = linear(ks[2], ks[3], hidden_dim, hidden_dim)
    w3, b3 = linear(ks[4], ks[5], hidden_dim, output_dim)
    return w1, b1, w2, b2, w3, b3


def ref_forward(x, w1, b1, w2, b2, w3, b3):
    """Pure-JAX f32 reference (same math as the torch module)."""
    hp = jax.lax.Precision.HIGHEST
    h = jnp.maximum(jnp.dot(x, w1, precision=hp) + b1, 0.0)
    h = jnp.maximum(jnp.dot(h, w2, precision=hp) + b2, 0.0)
    return jnp.dot(h, w3, precision=hp) + b3


if __name__ == "__main__":
    key = jax.random.PRNGKey(0)
    batch, input_dim, hidden_dim, output_dim = 256, 16, 64, 4

    k_x, k_p = jax.random.split(key)
    x = jax.random.normal(k_x, (batch, input_dim), jnp.float32)
    params = init_params(k_p, input_dim, output_dim, hidden_dim)

    # One-time padding / layout prep, outside the hot inference loop.
    padded_params, out_dim = prepare_params(*params)
    padded_params = tuple(jax.block_until_ready(p) for p in padded_params)

    # Default path: grid=(1,) on v5e/v6e, >=2 parallel tiles on v7x.
    fwd = jax.jit(functools.partial(dqn_forward, out_dim=out_dim))
    out = jax.block_until_ready(fwd(x, padded_params))

    # Explicitly exercise the multi-tile (pipelined / two-TC) path as well.
    fwd2 = jax.jit(functools.partial(dqn_forward, out_dim=out_dim, num_batch_tiles=2))
    out2 = jax.block_until_ready(fwd2(x, padded_params))

    ref = ref_forward(x, *params)
    assert out.shape == (batch, output_dim)
    assert out2.shape == (batch, output_dim)
    assert jnp.allclose(out, ref, atol=2e-2, rtol=2e-2), "mismatch vs f32 reference"
    assert jnp.allclose(out2, ref, atol=2e-2, rtol=2e-2), "mismatch vs f32 reference (tiled)"
    print("KERNEL_OK")
</pallas_src>

<mosaic_0001>
module attributes {stable_mosaic.version = 11 : i64} {
  func.func @dqn_mlp_kernel(%arg0: i32, %arg1: memref<256x16xf32, #tpu.memory_space<vmem>>, %arg2: memref<16x128xf32, #tpu.memory_space<vmem>>, %arg3: memref<1x128xf32, #tpu.memory_space<vmem>>, %arg4: memref<128x128xf32, #tpu.memory_space<vmem>>, %arg5: memref<1x128xf32, #tpu.memory_space<vmem>>, %arg6: memref<128x128xf32, #tpu.memory_space<vmem>>, %arg7: memref<1x128xf32, #tpu.memory_space<vmem>>, %arg8: memref<256x128xf32, #tpu.memory_space<vmem>>) attributes {dimension_semantics = [#tpu.dimension_semantics<parallel>], iteration_bounds = array<i64: 1>, scalar_prefetch = 0 : i64, scratch_operands = 0 : i64, tpu.core_type = #tpu.core_type<tc>, window_params = [{transform_indices = @transform_0, window_bounds = array<i64: 256, 16>}, {pipeline_mode = #tpu.pipeline_mode<synchronous>, transform_indices = @transform_1, window_bounds = array<i64: 16, 128>}, {pipeline_mode = #tpu.pipeline_mode<synchronous>, transform_indices = @transform_2, window_bounds = array<i64: 1, 128>}, {pipeline_mode = #tpu.pipeline_mode<synchronous>, transform_indices = @transform_3, window_bounds = array<i64: 128, 128>}, {pipeline_mode = #tpu.pipeline_mode<synchronous>, transform_indices = @transform_4, window_bounds = array<i64: 1, 128>}, {pipeline_mode = #tpu.pipeline_mode<synchronous>, transform_indices = @transform_5, window_bounds = array<i64: 128, 128>}, {pipeline_mode = #tpu.pipeline_mode<synchronous>, transform_indices = @transform_6, window_bounds = array<i64: 1, 128>}, {transform_indices = @transform_7, window_bounds = array<i64: 256, 128>}]} {
    %c0 = arith.constant 0 : index
    %c0_0 = arith.constant 0 : index
    %0 = vector.load %arg1[%c0, %c0_0] : memref<256x16xf32, #tpu.memory_space<vmem>>, vector<256x16xf32>
    %c0_1 = arith.constant 0 : index
    %c0_2 = arith.constant 0 : index
    %1 = vector.load %arg2[%c0_1, %c0_2] : memref<16x128xf32, #tpu.memory_space<vmem>>, vector<16x128xf32>
    %cst = arith.constant dense<0.000000e+00> : vector<256x128xf32>
    %2 = tpu.matmul %0, %1, %cst {dimension_numbers = #tpu.dot_dimension_numbers<[1], [0], [0], [1], [0, 0, 1, 1], [], []>} : vector<256x16xf32>, vector<16x128xf32>, vector<256x128xf32> -> vector<256x128xf32>
    %c0_3 = arith.constant 0 : index
    %c0_4 = arith.constant 0 : index
    %3 = vector.load %arg3[%c0_3, %c0_4] : memref<1x128xf32, #tpu.memory_space<vmem>>, vector<1x128xf32>
    %4 = vector.broadcast %3 : vector<1x128xf32> to vector<256x128xf32>
    %5 = arith.addf %2, %4 : vector<256x128xf32>
    %cst_5 = arith.constant 0.000000e+00 : f32
    %6 = vector.broadcast %cst_5 : f32 to vector<256x128xf32>
    %7 = arith.maximumf %5, %6 : vector<256x128xf32>
    %c0_6 = arith.constant 0 : index
    %c0_7 = arith.constant 0 : index
    %8 = vector.load %arg4[%c0_6, %c0_7] : memref<128x128xf32, #tpu.memory_space<vmem>>, vector<128x128xf32>
    %cst_8 = arith.constant dense<0.000000e+00> : vector<256x128xf32>
    %9 = tpu.matmul %7, %8, %cst_8 {dimension_numbers = #tpu.dot_dimension_numbers<[1], [0], [0], [1], [0, 0, 1, 1], [], []>} : vector<256x128xf32>, vector<128x128xf32>, vector<256x128xf32> -> vector<256x128xf32>
    %c0_9 = arith.constant 0 : index
    %c0_10 = arith.constant 0 : index
    %10 = vector.load %arg5[%c0_9, %c0_10] : memref<1x128xf32, #tpu.memory_space<vmem>>, vector<1x128xf32>
    %11 = vector.broadcast %10 : vector<1x128xf32> to vector<256x128xf32>
    %12 = arith.addf %9, %11 : vector<256x128xf32>
    %cst_11 = arith.constant 0.000000e+00 : f32
    %13 = vector.broadcast %cst_11 : f32 to vector<256x128xf32>
    %14 = arith.maximumf %12, %13 : vector<256x128xf32>
    %c0_12 = arith.constant 0 : index
    %c0_13 = arith.constant 0 : index
    %15 = vector.load %arg6[%c0_12, %c0_13] : memref<128x128xf32, #tpu.memory_space<vmem>>, vector<128x128xf32>
    %cst_14 = arith.constant dense<0.000000e+00> : vector<256x128xf32>
    %16 = tpu.matmul %14, %15, %cst_14 {dimension_numbers = #tpu.dot_dimension_numbers<[1], [0], [0], [1], [0, 0, 1, 1], [], []>} : vector<256x128xf32>, vector<128x128xf32>, vector<256x128xf32> -> vector<256x128xf32>
    %c0_15 = arith.constant 0 : index
    %c0_16 = arith.constant 0 : index
    %17 = vector.load %arg7[%c0_15, %c0_16] : memref<1x128xf32, #tpu.memory_space<vmem>>, vector<1x128xf32>
    %18 = vector.broadcast %17 : vector<1x128xf32> to vector<256x128xf32>
    %19 = arith.addf %16, %18 : vector<256x128xf32>
    %c0_17 = arith.constant 0 : index
    %c0_18 = arith.constant 0 : index
    %20 = vector.load %arg8[%c0_17, %c0_18] : memref<256x128xf32, #tpu.memory_space<vmem>>, vector<256x128xf32>
    tpu.vector_store %arg8[%c0_17, %c0_18], %19 {strides = array<i32>} : memref<256x128xf32, #tpu.memory_space<vmem>>, vector<256x128xf32>,
    return
  }
  func.func @transform_0(%arg0: i32) -> (i32, i32) {
    %c0_i32 = arith.constant 0 : i32
    %c0_i32_0 = arith.constant 0 : i32
    return %arg0, %c0_i32 : i32, i32
  }
  func.func @transform_1(%arg0: i32) -> (i32, i32) {
    %c0_i32 = arith.constant 0 : i32
    %c0_i32_0 = arith.constant 0 : i32
    %c0_i32_1 = arith.constant 0 : i32
    return %c0_i32, %c0_i32_0 : i32, i32
  }
  func.func @transform_2(%arg0: i32) -> (i32, i32) {
    %c0_i32 = arith.constant 0 : i32
    %c0_i32_0 = arith.constant 0 : i32
    %c0_i32_1 = arith.constant 0 : i32
    return %c0_i32, %c0_i32_0 : i32, i32
  }
  func.func @transform_3(%arg0: i32) -> (i32, i32) {
    %c0_i32 = arith.constant 0 : i32
    %c0_i32_0 = arith.constant 0 : i32
    %c0_i32_1 = arith.constant 0 : i32
    return %c0_i32, %c0_i32_0 : i32, i32
  }
  func.func @transform_4(%arg0: i32) -> (i32, i32) {
    %c0_i32 = arith.constant 0 : i32
    %c0_i32_0 = arith.constant 0 : i32
    %c0_i32_1 = arith.constant 0 : i32
    return %c0_i32, %c0_i32_0 : i32, i32
  }
  func.func @transform_5(%arg0: i32) -> (i32, i32) {
    %c0_i32 = arith.constant 0 : i32
    %c0_i32_0 = arith.constant 0 : i32
    %c0_i32_1 = arith.constant 0 : i32
    return %c0_i32, %c0_i32_0 : i32, i32
  }
  func.func @transform_6(%arg0: i32) -> (i32, i32) {
    %c0_i32 = arith.constant 0 : i32
    %c0_i32_0 = arith.constant 0 : i32
    %c0_i32_1 = arith.constant 0 : i32
    return %c0_i32, %c0_i32_0 : i32, i32
  }
  func.func @transform_7(%arg0: i32) -> (i32, i32) {
    %c0_i32 = arith.constant 0 : i32
    %c0_i32_0 = arith.constant 0 : i32
    return %arg0, %c0_i32 : i32, i32
  }
}

</mosaic_0001>

<llo_original>
// kernel: dqn_forward.1
$region0: #{dqn_forward.1}
  #allocation0 [shape = 'u32[]', space=smem, size = 0x4, offset = 0x4, fixed_abs, tag = 'smem constant byte address 0x4 - core index']
  #allocation1 [shape = 'u32[144,128]{1,0:T(1,128)}', space=vmem, size = 0x12000, scoped, tag = 'internal scratch']
  %s0 = inlined_call_operand.vmem [shape: f32[256,16], index: 0, kind: input, shape index: {}]
  %s1 = inlined_call_operand.vmem [shape: f32[16,128], index: 1, kind: input, shape index: {}]
  %s2 = inlined_call_operand.vmem [shape: f32[1,128], index: 2, kind: input, shape index: {}]
  %s3 = inlined_call_operand.vmem [shape: f32[128,128], index: 3, kind: input, shape index: {}]
  %s4 = inlined_call_operand.vmem [shape: f32[1,128], index: 4, kind: input, shape index: {}]
  %s5 = inlined_call_operand.vmem [shape: f32[128,128], index: 5, kind: input, shape index: {}]
  %s6 = inlined_call_operand.vmem [shape: f32[1,128], index: 6, kind: input, shape index: {}]
  %s7 = inlined_call_operand.vmem [shape: f32[256,128], index: 7, kind: output, shape index: {}]
  %s8 = sld [smem:[#allocation0]]
  $region38: #{dqn_forward.1} parent=0
    _
  %s10 = ssub.s32 1, %s8
  %s11 = scalar_select 0, %s10, %s8
  // Predicated region
  $region2: #{dqn_forward.1} parent=0 // pred_check
    _
  $region3: #{dqn_forward.1} parent=0 // pred_check_branch
    %13 = sbr.rel (0) target = $region5
  $region4: #{dqn_forward.1} parent=0 // pred_region
    _
  $region5: #{dqn_forward.1} parent=0 // pred_fallthru
    _
  // Predicated region
  $region6: #{dqn_forward.1} parent=0 // pred_check
    _
  $region7: #{dqn_forward.1} parent=0 // pred_check_branch
    %15 = sbr.rel (0) target = $region9
  $region8: #{dqn_forward.1} parent=0 // pred_region
    _
  $region9: #{dqn_forward.1} parent=0 // pred_fallthru
    _
  // Predicated region
  $region10: #{dqn_forward.1} parent=0 // pred_check
    _
  $region11: #{dqn_forward.1} parent=0 // pred_check_branch
    %17 = sbr.rel (0) target = $region13
  $region12: #{dqn_forward.1} parent=0 // pred_region
    _
  $region13: #{dqn_forward.1} parent=0 // pred_fallthru
    _
  // Predicated region
  $region14: #{dqn_forward.1} parent=0 // pred_check
    _
  $region15: #{dqn_forward.1} parent=0 // pred_check_branch
    %19 = sbr.rel (0) target = $region17
  $region16: #{dqn_forward.1} parent=0 // pred_region
    _
  $region17: #{dqn_forward.1} parent=0 // pred_fallthru
    _
  // Predicated region
  $region18: #{dqn_forward.1} parent=0 // pred_check
    _
  $region19: #{dqn_forward.1} parent=0 // pred_check_branch
    %21 = sbr.rel (0) target = $region21
  $region20: #{dqn_forward.1} parent=0 // pred_region
    _
  $region21: #{dqn_forward.1} parent=0 // pred_fallthru
    _
  // Predicated region
  $region22: #{dqn_forward.1} parent=0 // pred_check
    _
  $region23: #{dqn_forward.1} parent=0 // pred_check_branch
    %23 = sbr.rel (0) target = $region25
  $region24: #{dqn_forward.1} parent=0 // pred_region
    _
  $region25: #{dqn_forward.1} parent=0 // pred_fallthru
    _
  // Predicated region
  $region26: #{dqn_forward.1} parent=0 // pred_check
    _
  $region27: #{dqn_forward.1} parent=0 // pred_check_branch
    %25 = sbr.rel (0) target = $region29
  $region28: #{dqn_forward.1} parent=0 // pred_region
    _
  $region29: #{dqn_forward.1} parent=0 // pred_fallthru
    _
  %v26 = vld [vmem:[%s0] sm:$0xff]
  %v27 = vld [vmem:[%s0 + $0x8] sm:$0xff]
  %v28 = vld [vmem:[%s0 + $0x10] sm:$0xff]
  %v29 = vld [vmem:[%s0 + $0x18] sm:$0xff]
  %v30 = vld [vmem:[%s0 + $0x20] sm:$0xff]
  %v31 = vld [vmem:[%s0 + $0x28] sm:$0xff]
  %v32 = vld [vmem:[%s0 + $0x30] sm:$0xff]
  %v33 = vld [vmem:[%s0 + $0x38] sm:$0xff]
  %v34 = vld [vmem:[%s0 + $0x40] sm:$0xff]
  %v35 = vld [vmem:[%s0 + $0x48] sm:$0xff]
  %v36 = vld [vmem:[%s0 + $0x50] sm:$0xff]
  %v37 = vld [vmem:[%s0 + $0x58] sm:$0xff]
  %v38 = vld [vmem:[%s0 + $0x60] sm:$0xff]
  %v39 = vld [vmem:[%s0 + $0x68] sm:$0xff]
  %v40 = vld [vmem:[%s0 + $0x70] sm:$0xff]
  %v41 = vld [vmem:[%s0 + $0x78] sm:$0xff]
  %v42 = vld [vmem:[%s0 + $0x80] sm:$0xff]
  %v43 = vld [vmem:[%s0 + $0x88] sm:$0xff]
  %v44 = vld [vmem:[%s0 + $0x90] sm:$0xff]
  %v45 = vld [vmem:[%s0 + $0x98] sm:$0xff]
  %v46 = vld [vmem:[%s0 + $0xa0] sm:$0xff]
  %v47 = vld [vmem:[%s0 + $0xa8] sm:$0xff]
  %v48 = vld [vmem:[%s0 + $0xb0] sm:$0xff]
  %v49 = vld [vmem:[%s0 + $0xb8] sm:$0xff]
  %v50 = vld [vmem:[%s0 + $0xc0] sm:$0xff]
  %v51 = vld [vmem:[%s0 + $0xc8] sm:$0xff]
  %v52 = vld [vmem:[%s0 + $0xd0] sm:$0xff]
  %v53 = vld [vmem:[%s0 + $0xd8] sm:$0xff]
  %v54 = vld [vmem:[%s0 + $0xe0] sm:$0xff]
  %v55 = vld [vmem:[%s0 + $0xe8] sm:$0xff]
  %v56 = vld [vmem:[%s0 + $0xf0] sm:$0xff]
  %v57 = vld [vmem:[%s0 + $0xf8] sm:$0xff]
  %v58 = vld [vmem:[%s1] sm:$0xff]
  %v59 = vld [vmem:[%s1 + $0x8] sm:$0xff]
  %v60 = vld [vmem:[%s2] sm:$0x1]
  %v62 = vlaneseq
  %v63 = vshrl.u32 %v62, 7
  %v64 = vsub.s32 0, %v63
  %v65 = vrot.slane %v60, %v64
  %vm67 = vcmask 130048
  %v69 = vsel %vm67, %v26, 0
  %v72 = vsel %vm67, %v27, 0
  %v75 = vsel %vm67, %v28, 0
  %v78 = vsel %vm67, %v29, 0
  %v81 = vsel %vm67, %v30, 0
  %v84 = vsel %vm67, %v31, 0
  %v87 = vsel %vm67, %v32, 0
  %v90 = vsel %vm67, %v33, 0
  %v93 = vsel %vm67, %v34, 0
  %v96 = vsel %vm67, %v35, 0
  %v99 = vsel %vm67, %v36, 0
  %v102 = vsel %vm67, %v37, 0
  %v105 = vsel %vm67, %v38, 0
  %v108 = vsel %vm67, %v39, 0
  %v111 = vsel %vm67, %v40, 0
  %v114 = vsel %vm67, %v41, 0
  %v117 = vsel %vm67, %v42, 0
  %v120 = vsel %vm67, %v43, 0
  %v123 = vsel %vm67, %v44, 0
  %v126 = vsel %vm67, %v45, 0
  %v129 = vsel %vm67, %v46, 0
  %v132 = vsel %vm67, %v47, 0
  %v135 = vsel %vm67, %v48, 0
  %v138 = vsel %vm67, %v49, 0
  %v141 = vsel %vm67, %v50, 0
  %v144 = vsel %vm67, %v51, 0
  %v147 = vsel %vm67, %v52, 0
  %v150 = vsel %vm67, %v53, 0
  %v153 = vsel %vm67, %v54, 0
  %v156 = vsel %vm67, %v55, 0
  %v159 = vsel %vm67, %v56, 0
  %v162 = vsel %vm67, %v57, 0
  %164 = vmatprep.subr.mxu0 0.0
  %165 = vmatpush1.msra.mxu0 %v58
  %166 = vmatprep.subr.mxu0 0.0
  %167 = vmatpush1.msra.mxu0 %v59
  %168 = vmatprep.subr.mxu0 0.0
  %169 = vmatpush1.msra.mxu0 0.0
  %170 = vmatprep.subr.mxu0 0.0
  %171 = vmatpush1.msra.mxu0 0.0
  %172 = vmatprep.subr.mxu0 0.0
  %173 = vmatpush1.msra.mxu0 0.0
  %174 = vmatprep.subr.mxu0 0.0
  %175 = vmatpush1.msra.mxu0 0.0
  %176 = vmatprep.subr.mxu0 0.0
  %177 = vmatpush1.msra.mxu0 0.0
  %178 = vmatprep.subr.mxu0 0.0
  %179 = vmatpush1.msra.mxu0 0.0
  %180 = vmatprep.subr.mxu0 0.0
  %181 = vmatpush1.msra.mxu0 0.0
  %182 = vmatprep.subr.mxu0 0.0
  %183 = vmatpush1.msra.mxu0 0.0
  %184 = vmatprep.subr.mxu0 0.0
  %185 = vmatpush1.msra.mxu0 0.0
  %186 = vmatprep.subr.mxu0 0.0
  %187 = vmatpush1.msra.mxu0 0.0
  %188 = vmatprep.subr.mxu0 0.0
  %189 = vmatpush1.msra.mxu0 0.0
  %190 = vmatprep.subr.mxu0 0.0
  %191 = vmatpush1.msra.mxu0 0.0
  %192 = vmatprep.subr.mxu0 0.0
  %193 = vmatpush1.msra.mxu0 0.0
  %194 = vmatprep.subr.mxu0 0.0
  %195 = vmatpush1.msra.mxu0 0.0
  %196 = vmatprep.subr.mxu0 0.0
  %197 = vmatpush1.msra.mxu0 0.0
  %198 = vmatprep.subr.mxu0 0.0
  %199 = vmatpush1.msra.mxu0 0.0
  %200 = vmatprep.subr.mxu0 0.0
  %201 = vmatpush1.msra.mxu0 0.0
  %202 = vmatprep.subr.mxu0 0.0
  %203 = vmatpush1.msra.mxu0 0.0
  %204 = vmatprep.subr.mxu0 0.0
  %205 = vmatpush1.msra.mxu0 0.0
  %206 = vmatprep.subr.mxu0 0.0
  %207 = vmatpush1.msra.mxu0 0.0
  %208 = vmatprep.subr.mxu0 0.0
  %209 = vmatpush1.msra.mxu0 0.0
  %210 = vmatprep.subr.mxu0 0.0
  %211 = vmatpush1.msra.mxu0 0.0
  %212 = vmatprep.subr.mxu0 0.0
  %213 = vmatpush1.msra.mxu0 0.0
  %214 = vmatprep.subr.mxu0 0.0
  %215 = vmatpush1.msra.mxu0 0.0
  %216 = vmatprep.subr.mxu0 0.0
  %217 = vmatpush1.msra.mxu0 0.0
  %218 = vmatprep.subr.mxu0 0.0
  %219 = vmatpush1.msra.mxu0 0.0
  %220 = vmatprep.subr.mxu0 0.0
  %221 = vmatpush1.msra.mxu0 0.0
  %222 = vmatprep.subr.mxu0 0.0
  %223 = vmatpush1.msra.mxu0 0.0
  %224 = vmatprep.subr.mxu0 0.0
  %225 = vmatpush1.msra.mxu0 0.0
  %226 = vmatprep.subr.mxu0 0.0
  %227 = vmatpush1.msra.mxu0 0.0
  %228 = vmatprep.mubr.f32.mxu0 0.0
  %229 = vmatmul.mubr.f32.gmra.mrb[0].mxu0 %v69
  %v230 = vpop.f32.mrb[0].mxu0
  %v231 = vadd.f32 %v65, %v230
  %v232 = vpop.f32.mrb[0].mxu0
  %233 = vmatprep.mubr.f32.mxu0 0.0
  %234 = vmatmul.mubr.f32.gmra.mrb[0].mxu0 %v72
  %v235 = vpop.f32.mrb[0].mxu0
  %v236 = vadd.f32 %v65, %v235
  %v237 = vpop.f32.mrb[0].mxu0
  %238 = vmatprep.mubr.f32.mxu0 0.0
  %239 = vmatmul.mubr.f32.gmra.mrb[0].mxu0 %v75
  %v240 = vpop.f32.mrb[0].mxu0
  %v241 = vadd.f32 %v65, %v240
  %v242 = vpop.f32.mrb[0].mxu0
  %243 = vmatprep.mubr.f32.mxu0 0.0
  %244 = vmatmul.mubr.f32.gmra.mrb[0].mxu0 %v78
  %v245 = vpop.f32.mrb[0].mxu0
  %v246 = vadd.f32 %v65, %v245
  %v247 = vpop.f32.mrb[0].mxu0
  %248 = vmatprep.mubr.f32.mxu0 0.0
  %249 = vmatmul.mubr.f32.gmra.mrb[0].mxu0 %v81
  %v250 = vpop.f32.mrb[0].mxu0
  %v251 = vadd.f32 %v65, %v250
  %v252 = vpop.f32.mrb[0].mxu0
  %253 = vmatprep.mubr.f32.mxu0 0.0
  %254 = vmatmul.mubr.f32.gmra.mrb[0].mxu0 %v84
  %v255 = vpop.f32.mrb[0].mxu0
  %v256 = vadd.f32 %v65, %v255
  %v257 = vpop.f32.mrb[0].mxu0
  %258 = vmatprep.mubr.f32.mxu0 0.0
  %259 = vmatmul.mubr.f32.gmra.mrb[0].mxu0 %v87
  %v260 = vpop.f32.mrb[0].mxu0
  %v261 = vadd.f32 %v65, %v260
  %v262 = vpop.f32.mrb[0].mxu0
  %263 = vmatprep.mubr.f32.mxu0 0.0
  %264 = vmatmul.mubr.f32.gmra.mrb[0].mxu0 %v90
  %v265 = vpop.f32.mrb[0].mxu0
  %v266 = vadd.f32 %v65, %v265
  %v267 = vpop.f32.mrb[0].mxu0
  %268 = vmatprep.mubr.f32.mxu0 0.0
  %269 = vmatmul.mubr.f32.gmra.mrb[0].mxu0 %v93
  %v270 = vpop.f32.mrb[0].mxu0
  %v271 = vadd.f32 %v65, %v270
  %v272 = vpop.f32.mrb[0].mxu0
  %273 = vmatprep.mubr.f32.mxu0 0.0
  %274 = vmatmul.mubr.f32.gmra.mrb[0].mxu0 %v96
  %v275 = vpop.f32.mrb[0].mxu0
  %v276 = vadd.f32 %v65, %v275
  %v277 = vpop.f32.mrb[0].mxu0
  %278 = vmatprep.mubr.f32.mxu0 0.0
  %279 = vmatmul.mubr.f32.gmra.mrb[0].mxu0 %v99
  %v280 = vpop.f32.mrb[0].mxu0
  %v281 = vadd.f32 %v65, %v280
  %v282 = vpop.f32.mrb[0].mxu0
  %283 = vmatprep.mubr.f32.mxu0 0.0
  %284 = vmatmul.mubr.f32.gmra.mrb[0].mxu0 %v102
  %v285 = vpop.f32.mrb[0].mxu0
  %v286 = vadd.f32 %v65, %v285
  %v287 = vpop.f32.mrb[0].mxu0
  %288 = vmatprep.mubr.f32.mxu0 0.0
  %289 = vmatmul.mubr.f32.gmra.mrb[0].mxu0 %v105
  %v290 = vpop.f32.mrb[0].mxu0
  %v291 = vadd.f32 %v65, %v290
  %v292 = vpop.f32.mrb[0].mxu0
  %293 = vmatprep.mubr.f32.mxu0 0.0
  %294 = vmatmul.mubr.f32.gmra.mrb[0].mxu0 %v108
  %v295 = vpop.f32.mrb[0].mxu0
  %v296 = vadd.f32 %v65, %v295
  %v297 = vpop.f32.mrb[0].mxu0
  %298 = vmatprep.mubr.f32.mxu0 0.0
  %299 = vmatmul.mubr.f32.gmra.mrb[0].mxu0 %v111
  %v300 = vpop.f32.mrb[0].mxu0
  %v301 = vadd.f32 %v65, %v300
  %v302 = vpop.f32.mrb[0].mxu0
  %303 = vmatprep.mubr.f32.mxu0 0.0
  %304 = vmatmul.mubr.f32.gmra.mrb[0].mxu0 %v114
  %v305 = vpop.f32.mrb[0].mxu0
  %v306 = vadd.f32 %v65, %v305
  %v307 = vpop.f32.mrb[0].mxu0
  %308 = vmatprep.mubr.f32.mxu0 0.0
  %309 = vmatmul.mubr.f32.gmra.mrb[0].mxu0 %v117
  %v310 = vpop.f32.mrb[0].mxu0
  %v311 = vadd.f32 %v65, %v310
  %v312 = vpop.f32.mrb[0].mxu0
  %313 = vmatprep.mubr.f32.mxu0 0.0
  %314 = vmatmul.mubr.f32.gmra.mrb[0].mxu0 %v120
  %v315 = vpop.f32.mrb[0].mxu0
  %v316 = vadd.f32 %v65, %v315
  %v317 = vpop.f32.mrb[0].mxu0
  %318 = vmatprep.mubr.f32.mxu0 0.0
  %319 = vmatmul.mubr.f32.gmra.mrb[0].mxu0 %v123
  %v320 = vpop.f32.mrb[0].mxu0
  %v321 = vadd.f32 %v65, %v320
  %v322 = vpop.f32.mrb[0].mxu0
  %323 = vmatprep.mubr.f32.mxu0 0.0
  %324 = vmatmul.mubr.f32.gmra.mrb[0].mxu0 %v126
  %v325 = vpop.f32.mrb[0].mxu0
  %v326 = vadd.f32 %v65, %v325
  %v327 = vpop.f32.mrb[0].mxu0
  %328 = vmatprep.mubr.f32.mxu0 0.0
  %329 = vmatmul.mubr.f32.gmra.mrb[0].mxu0 %v129
  %v330 = vpop.f32.mrb[0].mxu0
  %v331 = vadd.f32 %v65, %v330
  %v332 = vpop.f32.mrb[0].mxu0
  %333 = vmatprep.mubr.f32.mxu0 0.0
  %334 = vmatmul.mubr.f32.gmra.mrb[0].mxu0 %v132
  %v335 = vpop.f32.mrb[0].mxu0
  %v336 = vadd.f32 %v65, %v335
  %v337 = vpop.f32.mrb[0].mxu0
  %338 = vmatprep.mubr.f32.mxu0 0.0
  %339 = vmatmul.mubr.f32.gmra.mrb[0].mxu0 %v135
  %v340 = vpop.f32.mrb[0].mxu0
  %v341 = vadd.f32 %v65, %v340
  %v342 = vpop.f32.mrb[0].mxu0
  %343 = vmatprep.mubr.f32.mxu0 0.0
  %344 = vmatmul.mubr.f32.gmra.mrb[0].mxu0 %v138
  %v345 = vpop.f32.mrb[0].mxu0
  %v346 = vadd.f32 %v65, %v345
  %v347 = vpop.f32.mrb[0].mxu0
  %348 = vmatprep.mubr.f32.mxu0 0.0
  %349 = vmatmul.mubr.f32.gmra.mrb[0].mxu0 %v141
  %v350 = vpop.f32.mrb[0].mxu0
  %v351 = vadd.f32 %v65, %v350
  %v352 = vpop.f32.mrb[0].mxu0
  %353 = vmatprep.mubr.f32.mxu0 0.0
  %354 = vmatmul.mubr.f32.gmra.mrb[0].mxu0 %v144
  %v355 = vpop.f32.mrb[0].mxu0
  %v356 = vadd.f32 %v65, %v355
  %v357 = vpop.f32.mrb[0].mxu0
  %358 = vmatprep.mubr.f32.mxu0 0.0
  %359 = vmatmul.mubr.f32.gmra.mrb[0].mxu0 %v147
  %v360 = vpop.f32.mrb[0].mxu0
  %v361 = vadd.f32 %v65, %v360
  %v362 = vpop.f32.mrb[0].mxu0
  %363 = vmatprep.mubr.f32.mxu0 0.0
  %364 = vmatmul.mubr.f32.gmra.mrb[0].mxu0 %v150
  %v365 = vpop.f32.mrb[0].mxu0
  %v366 = vadd.f32 %v65, %v365
  %v367 = vpop.f32.mrb[0].mxu0
  %368 = vmatprep.mubr.f32.mxu0 0.0
  %369 = vmatmul.mubr.f32.gmra.mrb[0].mxu0 %v153
  %v370 = vpop.f32.mrb[0].mxu0
  %v371 = vadd.f32 %v65, %v370
  %v372 = vpop.f32.mrb[0].mxu0
  %373 = vmatprep.mubr.f32.mxu0 0.0
  %374 = vmatmul.mubr.f32.gmra.mrb[0].mxu0 %v156
  %v375 = vpop.f32.mrb[0].mxu0
  %v376 = vadd.f32 %v65, %v375
  %v377 = vpop.f32.mrb[0].mxu0
  %378 = vmatprep.mubr.f32.mxu0 0.0
  %379 = vmatmul.mubr.f32.gmra.mrb[0].mxu0 %v159
  %v380 = vpop.f32.mrb[0].mxu0
  %v381 = vadd.f32 %v65, %v380
  %v382 = vpop.f32.mrb[0].mxu0
  %383 = vmatprep.mubr.f32.mxu0 0.0
  %384 = vmatmul.mubr.f32.gmra.mrb[0].mxu0 %v162
  %v385 = vpop.f32.mrb[0].mxu0
  %v386 = vadd.f32 %v65, %v385
  %v387 = vpop.f32.mrb[0].mxu0
  %388 = vdwg.mxu0
  %v389 = vmax.f32 %v231, 0.0
  %v390 = vmax.f32 %v236, 0.0
  %v391 = vmax.f32 %v241, 0.0
  %v392 = vmax.f32 %v246, 0.0
  %v393 = vmax.f32 %v251, 0.0
  %v394 = vmax.f32 %v256, 0.0
  %v395 = vmax.f32 %v261, 0.0
  %v396 = vmax.f32 %v266, 0.0
  %v397 = vmax.f32 %v271, 0.0
  %v398 = vmax.f32 %v276, 0.0
  %v399 = vmax.f32 %v281, 0.0
  %v400 = vmax.f32 %v286, 0.0
  %v401 = vmax.f32 %v291, 0.0
  %v402 = vmax.f32 %v296, 0.0
  %v403 = vmax.f32 %v301, 0.0
  %v404 = vmax.f32 %v306, 0.0
  %v405 = vmax.f32 %v311, 0.0
  %v406 = vmax.f32 %v316, 0.0
  %v407 = vmax.f32 %v321, 0.0
  %v408 = vmax.f32 %v326, 0.0
  %v409 = vmax.f32 %v331, 0.0
  %v410 = vmax.f32 %v336, 0.0
  %v411 = vmax.f32 %v341, 0.0
  %v412 = vmax.f32 %v346, 0.0
  %v413 = vmax.f32 %v351, 0.0
  %v414 = vmax.f32 %v356, 0.0
  %v415 = vmax.f32 %v361, 0.0
  %v416 = vmax.f32 %v366, 0.0
  %v417 = vmax.f32 %v371, 0.0
  %v418 = vmax.f32 %v376, 0.0
  %v419 = vmax.f32 %v381, 0.0
  %v420 = vmax.f32 %v386, 0.0
  %v421 = vld [vmem:[%s3] sm:$0xff]
  %v422 = vld [vmem:[%s3 + $0x8] sm:$0xff]
  %v423 = vld [vmem:[%s3 + $0x10] sm:$0xff]
  %v424 = vld [vmem:[%s3 + $0x18] sm:$0xff]
  %v425 = vld [vmem:[%s3 + $0x20] sm:$0xff]
  %v426 = vld [vmem:[%s3 + $0x28] sm:$0xff]
  %v427 = vld [vmem:[%s3 + $0x30] sm:$0xff]
  %v428 = vld [vmem:[%s3 + $0x38] sm:$0xff]
  %v429 = vld [vmem:[%s3 + $0x40] sm:$0xff]
  %v430 = vld [vmem:[%s3 + $0x48] sm:$0xff]
  %v431 = vld [vmem:[%s3 + $0x50] sm:$0xff]
  %v432 = vld [vmem:[%s3 + $0x58] sm:$0xff]
  %v433 = vld [vmem:[%s3 + $0x60] sm:$0xff]
  %v434 = vld [vmem:[%s3 + $0x68] sm:$0xff]
  %v435 = vld [vmem:[%s3 + $0x70] sm:$0xff]
  %v436 = vld [vmem:[%s3 + $0x78] sm:$0xff]
  %v437 = vld [vmem:[%s4] sm:$0x1]
  %v439 = vlaneseq
  %v440 = vshrl.u32 %v439, 7
  %v441 = vsub.s32 0, %v440
  %v442 = vrot.slane %v437, %v441
  %444 = vmatprep.subr.mxu0 0.0
  %445 = vmatpush1.msra.mxu0 %v421
  %446 = vmatprep.subr.mxu0 0.0
  %447 = vmatpush1.msra.mxu0 %v422
  %448 = vmatprep.subr.mxu0 0.0
  %449 = vmatpush1.msra.mxu0 %v423
  %450 = vmatprep.subr.mxu0 0.0
  %451 = vmatpush1.msra.mxu0 %v424
  %452 = vmatprep.subr.mxu0 0.0
  %453 = vmatpush1.msra.mxu0 %v425
  %454 = vmatprep.subr.mxu0 0.0
  %455 = vmatpush1.msra.mxu0 %v426
  %456 = vmatprep.subr.mxu0 0.0
  %457 = vmatpush1.msra.mxu0 %v427
  %458 = vmatprep.subr.mxu0 0.0
  %459 = vmatpush1.msra.mxu0 %v428
  %460 = vmatprep.subr.mxu0 0.0
  %461 = vmatpush1.msra.mxu0 %v429
  %462 = vmatprep.subr.mxu0 0.0
  %463 = vmatpush1.msra.mxu0 %v430
  %464 = vmatprep.subr.mxu0 0.0
  %465 = vmatpush1.msra.mxu0 %v431
  %466 = vmatprep.subr.mxu0 0.0
  %467 = vmatpush1.msra.mxu0 %v432
  %468 = vmatprep.subr.mxu0 0.0
  %469 = vmatpush1.msra.mxu0 %v433
  %470 = vmatprep.subr.mxu0 0.0
  %471 = vmatpush1.msra.mxu0 %v434
  %472 = vmatprep.subr.mxu0 0.0
  %473 = vmatpush1.msra.mxu0 %v435
  %474 = vmatprep.subr.mxu0 0.0
  %475 = vmatpush1.msra.mxu0 %v436
  %476 = vmatprep.subr.mxu0 0.0
  %477 = vmatpush1.msra.mxu0 0.0
  %478 = vmatprep.subr.mxu0 0.0
  %479 = vmatpush1.msra.mxu0 0.0
  %480 = vmatprep.subr.mxu0 0.0
  %481 = vmatpush1.msra.mxu0 0.0
  %482 = vmatprep.subr.mxu0 0.0
  %483 = vmatpush1.msra.mxu0 0.0
  %484 = vmatprep.subr.mxu0 0.0
  %485 = vmatpush1.msra.mxu0 0.0
  %486 = vmatprep.subr.mxu0 0.0
  %487 = vmatpush1.msra.mxu0 0.0
  %488 = vmatprep.subr.mxu0 0.0
  %489 = vmatpush1.msra.mxu0 0.0
  %490 = vmatprep.subr.mxu0 0.0
  %491 = vmatpush1.msra.mxu0 0.0
  %492 = vmatprep.subr.mxu0 0.0
  %493 = vmatpush1.msra.mxu0 0.0
  %494 = vmatprep.subr.mxu0 0.0
  %495 = vmatpush1.msra.mxu0 0.0
  %496 = vmatprep.subr.mxu0 0.0
  %497 = vmatpush1.msra.mxu0 0.0
  %498 = vmatprep.subr.mxu0 0.0
  %499 = vmatpush1.msra.mxu0 0.0
  %500 = vmatprep.subr.mxu0 0.0
  %501 = vmatpush1.msra.mxu0 0.0
  %502 = vmatprep.subr.mxu0 0.0
  %503 = vmatpush1.msra.mxu0 0.0
  %504 = vmatprep.subr.mxu0 0.0
  %505 = vmatpush1.msra.mxu0 0.0
  %506 = vmatprep.subr.mxu0 0.0
  %507 = vmatpush1.msra.mxu0 0.0
  %508 = vmatprep.mubr.f32.mxu0 0.0
  %509 = vmatmul.mubr.f32.gmra.mrb[0].mxu0 %v389
  %v510 = vpop.f32.mrb[0].mxu0
  %v511 = vadd.f32 %v442, %v510
  %v512 = vpop.f32.mrb[0].mxu0
  %513 = vmatprep.mubr.f32.mxu0 0.0
  %514 = vmatmul.mubr.f32.gmra.mrb[0].mxu0 %v390
  %v515 = vpop.f32.mrb[0].mxu0
  %v516 = vadd.f32 %v442, %v515
  %v517 = vpop.f32.mrb[0].mxu0
  %518 = vmatprep.mubr.f32.mxu0 0.0
  %519 = vmatmul.mubr.f32.gmra.mrb[0].mxu0 %v391
  %v520 = vpop.f32.mrb[0].mxu0
  %v521 = vadd.f32 %v442, %v520
  %v522 = vpop.f32.mrb[0].mxu0
  %523 = vmatprep.mubr.f32.mxu0 0.0
  %524 = vmatmul.mubr.f32.gmra.mrb[0].mxu0 %v392
  %v525 = vpop.f32.mrb[0].mxu0
  %v526 = vadd.f32 %v442, %v525
  %v527 = vpop.f32.mrb[0].mxu0
  %528 = vmatprep.mubr.f32.mxu0 0.0
  %529 = vmatmul.mubr.f32.gmra.mrb[0].mxu0 %v393
  %v530 = vpop.f32.mrb[0].mxu0
  %v531 = vadd.f32 %v442, %v530
  %v532 = vpop.f32.mrb[0].mxu0
  %533 = vmatprep.mubr.f32.mxu0 0.0
  %534 = vmatmul.mubr.f32.gmra.mrb[0].mxu0 %v394
  %v535 = vpop.f32.mrb[0].mxu0
  %v536 = vadd.f32 %v442, %v535
  %v537 = vpop.f32.mrb[0].mxu0
  %538 = vmatprep.mubr.f32.mxu0 0.0
  %539 = vmatmul.mubr.f32.gmra.mrb[0].mxu0 %v395
  %v540 = vpop.f32.mrb[0].mxu0
  %v541 = vadd.f32 %v442, %v540
  %v542 = vpop.f32.mrb[0].mxu0
  %543 = vmatprep.mubr.f32.mxu0 0.0
  %544 = vmatmul.mubr.f32.gmra.mrb[0].mxu0 %v396
  %v545 = vpop.f32.mrb[0].mxu0
  %v546 = vadd.f32 %v442, %v545
  %v547 = vpop.f32.mrb[0].mxu0
  %548 = vmatprep.mubr.f32.mxu0 0.0
  %549 = vmatmul.mubr.f32.gmra.mrb[0].mxu0 %v397
  %v550 = vpop.f32.mrb[0].mxu0
  %v551 = vadd.f32 %v442, %v550
  %v552 = vpop.f32.mrb[0].mxu0
  %553 = vmatprep.mubr.f32.mxu0 0.0
  %554 = vmatmul.mubr.f32.gmra.mrb[0].mxu0 %v398
  %v555 = vpop.f32.mrb[0].mxu0
  %v556 = vadd.f32 %v442, %v555
  %v557 = vpop.f32.mrb[0].mxu0
  %558 = vmatprep.mubr.f32.mxu0 0.0
  %559 = vmatmul.mubr.f32.gmra.mrb[0].mxu0 %v399
  %v560 = vpop.f32.mrb[0].mxu0
  %v561 = vadd.f32 %v442, %v560
  %v562 = vpop.f32.mrb[0].mxu0
  %563 = vmatprep.mubr.f32.mxu0 0.0
  %564 = vmatmul.mubr.f32.gmra.mrb[0].mxu0 %v400
  %v565 = vpop.f32.mrb[0].mxu0
  %v566 = vadd.f32 %v442, %v565
  %v567 = vpop.f32.mrb[0].mxu0
  %568 = vmatprep.mubr.f32.mxu0 0.0
  %569 = vmatmul.mubr.f32.gmra.mrb[0].mxu0 %v401
  %v570 = vpop.f32.mrb[0].mxu0
  %v571 = vadd.f32 %v442, %v570
  %v572 = vpop.f32.mrb[0].mxu0
  %573 = vmatprep.mubr.f32.mxu0 0.0
  %574 = vmatmul.mubr.f32.gmra.mrb[0].mxu0 %v402
  %v575 = vpop.f32.mrb[0].mxu0
  %v576 = vadd.f32 %v442, %v575
  %v577 = vpop.f32.mrb[0].mxu0
  %578 = vmatprep.mubr.f32.mxu0 0.0
  %579 = vmatmul.mubr.f32.gmra.mrb[0].mxu0 %v403
  %v580 = vpop.f32.mrb[0].mxu0
  %v581 = vadd.f32 %v442, %v580
  %v582 = vpop.f32.mrb[0].mxu0
  %583 = vmatprep.mubr.f32.mxu0 0.0
  %584 = vmatmul.mubr.f32.gmra.mrb[0].mxu0 %v404
  %v585 = vpop.f32.mrb[0].mxu0
  %v586 = vadd.f32 %v442, %v585
  %v587 = vpop.f32.mrb[0].mxu0
  %588 = vmatprep.mubr.f32.mxu0 0.0
  %589 = vmatmul.mubr.f32.gmra.mrb[0].mxu0 %v405
  %v590 = vpop.f32.mrb[0].mxu0
  %v591 = vadd.f32 %v442, %v590
  %v592 = vpop.f32.mrb[0].mxu0
  %593 = vmatprep.mubr.f32.mxu0 0.0
  %594 = vmatmul.mubr.f32.gmra.mrb[0].mxu0 %v406
  %v595 = vpop.f32.mrb[0].mxu0
  %v596 = vadd.f32 %v442, %v595
  %v597 = vpop.f32.mrb[0].mxu0
  %598 = vmatprep.mubr.f32.mxu0 0.0
  %599 = vmatmul.mubr.f32.gmra.mrb[0].mxu0 %v407
  %v600 = vpop.f32.mrb[0].mxu0
  %v601 = vadd.f32 %v442, %v600
  %v602 = vpop.f32.mrb[0].mxu0
  %603 = vmatprep.mubr.f32.mxu0 0.0
  %604 = vmatmul.mubr.f32.gmra.mrb[0].mxu0 %v408
  %v605 = vpop.f32.mrb[0].mxu0
  %v606 = vadd.f32 %v442, %v605
  %v607 = vpop.f32.mrb[0].mxu0
  %608 = vmatprep.mubr.f32.mxu0 0.0
  %609 = vmatmul.mubr.f32.gmra.mrb[0].mxu0 %v409
  %v610 = vpop.f32.mrb[0].mxu0
  %v611 = vadd.f32 %v442, %v610
  %v612 = vpop.f32.mrb[0].mxu0
  %613 = vmatprep.mubr.f32.mxu0 0.0
  %614 = vmatmul.mubr.f32.gmra.mrb[0].mxu0 %v410
  %v615 = vpop.f32.mrb[0].mxu0
  %v616 = vadd.f32 %v442, %v615
  %v617 = vpop.f32.mrb[0].mxu0
  %618 = vmatprep.mubr.f32.mxu0 0.0
  %619 = vmatmul.mubr.f32.gmra.mrb[0].mxu0 %v411
  %v620 = vpop.f32.mrb[0].mxu0
  %v621 = vadd.f32 %v442, %v620
  %v622 = vpop.f32.mrb[0].mxu0
  %623 = vmatprep.mubr.f32.mxu0 0.0
  %624 = vmatmul.mubr.f32.gmra.mrb[0].mxu0 %v412
  %v625 = vpop.f32.mrb[0].mxu0
  %v626 = vadd.f32 %v442, %v625
  %v627 = vpop.f32.mrb[0].mxu0
  %628 = vmatprep.mubr.f32.mxu0 0.0
  %629 = vmatmul.mubr.f32.gmra.mrb[0].mxu0 %v413
  %v630 = vpop.f32.mrb[0].mxu0
  %v631 = vadd.f32 %v442, %v630
  %v632 = vpop.f32.mrb[0].mxu0
  %633 = vmatprep.mubr.f32.mxu0 0.0
  %634 = vmatmul.mubr.f32.gmra.mrb[0].mxu0 %v414
  %v635 = vpop.f32.mrb[0].mxu0
  %v636 = vadd.f32 %v442, %v635
  %v637 = vpop.f32.mrb[0].mxu0
  %638 = vmatprep.mubr.f32.mxu0 0.0
  %639 = vmatmul.mubr.f32.gmra.mrb[0].mxu0 %v415
  %v640 = vpop.f32.mrb[0].mxu0
  %v641 = vadd.f32 %v442, %v640
  %v642 = vpop.f32.mrb[0].mxu0
  %643 = vmatprep.mubr.f32.mxu0 0.0
  %644 = vmatmul.mubr.f32.gmra.mrb[0].mxu0 %v416
  %v645 = vpop.f32.mrb[0].mxu0
  %v646 = vadd.f32 %v442, %v645
  %v647 = vpop.f32.mrb[0].mxu0
  %648 = vmatprep.mubr.f32.mxu0 0.0
  %649 = vmatmul.mubr.f32.gmra.mrb[0].mxu0 %v417
  %v650 = vpop.f32.mrb[0].mxu0
  %v651 = vadd.f32 %v442, %v650
  %v652 = vpop.f32.mrb[0].mxu0
  %653 = vmatprep.mubr.f32.mxu0 0.0
  %654 = vmatmul.mubr.f32.gmra.mrb[0].mxu0 %v418
  %v655 = vpop.f32.mrb[0].mxu0
  %v656 = vadd.f32 %v442, %v655
  %v657 = vpop.f32.mrb[0].mxu0
  %658 = vmatprep.mubr.f32.mxu0 0.0
  %659 = vmatmul.mubr.f32.gmra.mrb[0].mxu0 %v419
  %v660 = vpop.f32.mrb[0].mxu0
  %v661 = vadd.f32 %v442, %v660
  %v662 = vpop.f32.mrb[0].mxu0
  %663 = vmatprep.mubr.f32.mxu0 0.0
  %664 = vmatmul.mubr.f32.gmra.mrb[0].mxu0 %v420
  %v665 = vpop.f32.mrb[0].mxu0
  %v666 = vadd.f32 %v442, %v665
  %v667 = vpop.f32.mrb[0].mxu0
  %668 = vdwg.mxu0
  %v669 = vmax.f32 %v511, 0.0
  %v670 = vmax.f32 %v516, 0.0
  %v671 = vmax.f32 %v521, 0.0
  %v672 = vmax.f32 %v526, 0.0
  %v673 = vmax.f32 %v531, 0.0
  %v674 = vmax.f32 %v536, 0.0
  %v675 = vmax.f32 %v541, 0.0
  %v676 = vmax.f32 %v546, 0.0
  %v677 = vmax.f32 %v551, 0.0
  %v678 = vmax.f32 %v556, 0.0
  %v679 = vmax.f32 %v561, 0.0
  %v680 = vmax.f32 %v566, 0.0
  %v681 = vmax.f32 %v571, 0.0
  %v682 = vmax.f32 %v576, 0.0
  %v683 = vmax.f32 %v581, 0.0
  %v684 = vmax.f32 %v586, 0.0
  %v685 = vmax.f32 %v591, 0.0
  %v686 = vmax.f32 %v596, 0.0
  %v687 = vmax.f32 %v601, 0.0
  %v688 = vmax.f32 %v606, 0.0
  %v689 = vmax.f32 %v611, 0.0
  %v690 = vmax.f32 %v616, 0.0
  %v691 = vmax.f32 %v621, 0.0
  %v692 = vmax.f32 %v626, 0.0
  %v693 = vmax.f32 %v631, 0.0
  %v694 = vmax.f32 %v636, 0.0
  %v695 = vmax.f32 %v641, 0.0
  %v696 = vmax.f32 %v646, 0.0
  %v697 = vmax.f32 %v651, 0.0
  %v698 = vmax.f32 %v656, 0.0
  %v699 = vmax.f32 %v661, 0.0
  %v700 = vmax.f32 %v666, 0.0
  %v701 = vld [vmem:[%s5] sm:$0xff]
  %v702 = vld [vmem:[%s5 + $0x8] sm:$0xff]
  %v703 = vld [vmem:[%s5 + $0x10] sm:$0xff]
  %v704 = vld [vmem:[%s5 + $0x18] sm:$0xff]
  %v705 = vld [vmem:[%s5 + $0x20] sm:$0xff]
  %v706 = vld [vmem:[%s5 + $0x28] sm:$0xff]
  %v707 = vld [vmem:[%s5 + $0x30] sm:$0xff]
  %v708 = vld [vmem:[%s5 + $0x38] sm:$0xff]
  %v709 = vld [vmem:[%s5 + $0x40] sm:$0xff]
  %v710 = vld [vmem:[%s5 + $0x48] sm:$0xff]
  %v711 = vld [vmem:[%s5 + $0x50] sm:$0xff]
  %v712 = vld [vmem:[%s5 + $0x58] sm:$0xff]
  %v713 = vld [vmem:[%s5 + $0x60] sm:$0xff]
  %v714 = vld [vmem:[%s5 + $0x68] sm:$0xff]
  %v715 = vld [vmem:[%s5 + $0x70] sm:$0xff]
  %v716 = vld [vmem:[%s5 + $0x78] sm:$0xff]
  %v717 = vld [vmem:[%s6] sm:$0x1]
  %v719 = vlaneseq
  %v720 = vshrl.u32 %v719, 7
  %v721 = vsub.s32 0, %v720
  %v722 = vrot.slane %v717, %v721
  %724 = vmatprep.subr.mxu0 0.0
  %725 = vmatpush1.msra.mxu0 %v701
  %726 = vmatprep.subr.mxu0 0.0
  %727 = vmatpush1.msra.mxu0 %v702
  %728 = vmatprep.subr.mxu0 0.0
  %729 = vmatpush1.msra.mxu0 %v703
  %730 = vmatprep.subr.mxu0 0.0
  %731 = vmatpush1.msra.mxu0 %v704
  %732 = vmatprep.subr.mxu0 0.0
  %733 = vmatpush1.msra.mxu0 %v705
  %734 = vmatprep.subr.mxu0 0.0
  %735 = vmatpush1.msra.mxu0 %v706
  %736 = vmatprep.subr.mxu0 0.0
  %737 = vmatpush1.msra.mxu0 %v707
  %738 = vmatprep.subr.mxu0 0.0
  %739 = vmatpush1.msra.mxu0 %v708
  %740 = vmatprep.subr.mxu0 0.0
  %741 = vmatpush1.msra.mxu0 %v709
  %742 = vmatprep.subr.mxu0 0.0
  %743 = vmatpush1.msra.mxu0 %v710
  %744 = vmatprep.subr.mxu0 0.0
  %745 = vmatpush1.msra.mxu0 %v711
  %746 = vmatprep.subr.mxu0 0.0
  %747 = vmatpush1.msra.mxu0 %v712
  %748 = vmatprep.subr.mxu0 0.0
  %749 = vmatpush1.msra.mxu0 %v713
  %750 = vmatprep.subr.mxu0 0.0
  %751 = vmatpush1.msra.mxu0 %v714
  %752 = vmatprep.subr.mxu0 0.0
  %753 = vmatpush1.msra.mxu0 %v715
  %754 = vmatprep.subr.mxu0 0.0
  %755 = vmatpush1.msra.mxu0 %v716
  %756 = vmatprep.subr.mxu0 0.0
  %757 = vmatpush1.msra.mxu0 0.0
  %758 = vmatprep.subr.mxu0 0.0
  %759 = vmatpush1.msra.mxu0 0.0
  %760 = vmatprep.subr.mxu0 0.0
  %761 = vmatpush1.msra.mxu0 0.0
  %762 = vmatprep.subr.mxu0 0.0
  %763 = vmatpush1.msra.mxu0 0.0
  %764 = vmatprep.subr.mxu0 0.0
  %765 = vmatpush1.msra.mxu0 0.0
  %766 = vmatprep.subr.mxu0 0.0
  %767 = vmatpush1.msra.mxu0 0.0
  %768 = vmatprep.subr.mxu0 0.0
  %769 = vmatpush1.msra.mxu0 0.0
  %770 = vmatprep.subr.mxu0 0.0
  %771 = vmatpush1.msra.mxu0 0.0
  %772 = vmatprep.subr.mxu0 0.0
  %773 = vmatpush1.msra.mxu0 0.0
  %774 = vmatprep.subr.mxu0 0.0
  %775 = vmatpush1.msra.mxu0 0.0
  %776 = vmatprep.subr.mxu0 0.0
  %777 = vmatpush1.msra.mxu0 0.0
  %778 = vmatprep.subr.mxu0 0.0
  %779 = vmatpush1.msra.mxu0 0.0
  %780 = vmatprep.subr.mxu0 0.0
  %781 = vmatpush1.msra.mxu0 0.0
  %782 = vmatprep.subr.mxu0 0.0
  %783 = vmatpush1.msra.mxu0 0.0
  %784 = vmatprep.subr.mxu0 0.0
  %785 = vmatpush1.msra.mxu0 0.0
  %786 = vmatprep.subr.mxu0 0.0
  %787 = vmatpush1.msra.mxu0 0.0
  %788 = vmatprep.mubr.f32.mxu0 0.0
  %789 = vmatmul.mubr.f32.gmra.mrb[0].mxu0 %v669
  %v790 = vpop.f32.mrb[0].mxu0
  %v791 = vadd.f32 %v722, %v790
  %v792 = vpop.f32.mrb[0].mxu0
  %793 = vmatprep.mubr.f32.mxu0 0.0
  %794 = vmatmul.mubr.f32.gmra.mrb[0].mxu0 %v670
  %v795 = vpop.f32.mrb[0].mxu0
  %v796 = vadd.f32 %v722, %v795
  %v797 = vpop.f32.mrb[0].mxu0
  %798 = vmatprep.mubr.f32.mxu0 0.0
  %799 = vmatmul.mubr.f32.gmra.mrb[0].mxu0 %v671
  %v800 = vpop.f32.mrb[0].mxu0
  %v801 = vadd.f32 %v722, %v800
  %v802 = vpop.f32.mrb[0].mxu0
  %803 = vmatprep.mubr.f32.mxu0 0.0
  %804 = vmatmul.mubr.f32.gmra.mrb[0].mxu0 %v672
  %v805 = vpop.f32.mrb[0].mxu0
  %v806 = vadd.f32 %v722, %v805
  %v807 = vpop.f32.mrb[0].mxu0
  %808 = vmatprep.mubr.f32.mxu0 0.0
  %809 = vmatmul.mubr.f32.gmra.mrb[0].mxu0 %v673
  %v810 = vpop.f32.mrb[0].mxu0
  %v811 = vadd.f32 %v722, %v810
  %v812 = vpop.f32.mrb[0].mxu0
  %813 = vmatprep.mubr.f32.mxu0 0.0
  %814 = vmatmul.mubr.f32.gmra.mrb[0].mxu0 %v674
  %v815 = vpop.f32.mrb[0].mxu0
  %v816 = vadd.f32 %v722, %v815
  %v817 = vpop.f32.mrb[0].mxu0
  %818 = vmatprep.mubr.f32.mxu0 0.0
  %819 = vmatmul.mubr.f32.gmra.mrb[0].mxu0 %v675
  %v820 = vpop.f32.mrb[0].mxu0
  %v821 = vadd.f32 %v722, %v820
  %v822 = vpop.f32.mrb[0].mxu0
  %823 = vmatprep.mubr.f32.mxu0 0.0
  %824 = vmatmul.mubr.f32.gmra.mrb[0].mxu0 %v676
  %v825 = vpop.f32.mrb[0].mxu0
  %v826 = vadd.f32 %v722, %v825
  %v827 = vpop.f32.mrb[0].mxu0
  %828 = vmatprep.mubr.f32.mxu0 0.0
  %829 = vmatmul.mubr.f32.gmra.mrb[0].mxu0 %v677
  %v830 = vpop.f32.mrb[0].mxu0
  %v831 = vadd.f32 %v722, %v830
  %v832 = vpop.f32.mrb[0].mxu0
  %833 = vmatprep.mubr.f32.mxu0 0.0
  %834 = vmatmul.mubr.f32.gmra.mrb[0].mxu0 %v678
  %v835 = vpop.f32.mrb[0].mxu0
  %v836 = vadd.f32 %v722, %v835
  %v837 = vpop.f32.mrb[0].mxu0
  %838 = vmatprep.mubr.f32.mxu0 0.0
  %839 = vmatmul.mubr.f32.gmra.mrb[0].mxu0 %v679
  %v840 = vpop.f32.mrb[0].mxu0
  %v841 = vadd.f32 %v722, %v840
  %v842 = vpop.f32.mrb[0].mxu0
  %843 = vmatprep.mubr.f32.mxu0 0.0
  %844 = vmatmul.mubr.f32.gmra.mrb[0].mxu0 %v680
  %v845 = vpop.f32.mrb[0].mxu0
  %v846 = vadd.f32 %v722, %v845
  %v847 = vpop.f32.mrb[0].mxu0
  %848 = vmatprep.mubr.f32.mxu0 0.0
  %849 = vmatmul.mubr.f32.gmra.mrb[0].mxu0 %v681
  %v850 = vpop.f32.mrb[0].mxu0
  %v851 = vadd.f32 %v722, %v850
  %v852 = vpop.f32.mrb[0].mxu0
  %853 = vmatprep.mubr.f32.mxu0 0.0
  %854 = vmatmul.mubr.f32.gmra.mrb[0].mxu0 %v682
  %v855 = vpop.f32.mrb[0].mxu0
  %v856 = vadd.f32 %v722, %v855
  %v857 = vpop.f32.mrb[0].mxu0
  %858 = vmatprep.mubr.f32.mxu0 0.0
  %859 = vmatmul.mubr.f32.gmra.mrb[0].mxu0 %v683
  %v860 = vpop.f32.mrb[0].mxu0
  %v861 = vadd.f32 %v722, %v860
  %v862 = vpop.f32.mrb[0].mxu0
  %863 = vmatprep.mubr.f32.mxu0 0.0
  %864 = vmatmul.mubr.f32.gmra.mrb[0].mxu0 %v684
  %v865 = vpop.f32.mrb[0].mxu0
  %v866 = vadd.f32 %v722, %v865
  %v867 = vpop.f32.mrb[0].mxu0
  %868 = vmatprep.mubr.f32.mxu0 0.0
  %869 = vmatmul.mubr.f32.gmra.mrb[0].mxu0 %v685
  %v870 = vpop.f32.mrb[0].mxu0
  %v871 = vadd.f32 %v722, %v870
  %v872 = vpop.f32.mrb[0].mxu0
  %873 = vmatprep.mubr.f32.mxu0 0.0
  %874 = vmatmul.mubr.f32.gmra.mrb[0].mxu0 %v686
  %v875 = vpop.f32.mrb[0].mxu0
  %v876 = vadd.f32 %v722, %v875
  %v877 = vpop.f32.mrb[0].mxu0
  %878 = vmatprep.mubr.f32.mxu0 0.0
  %879 = vmatmul.mubr.f32.gmra.mrb[0].mxu0 %v687
  %v880 = vpop.f32.mrb[0].mxu0
  %v881 = vadd.f32 %v722, %v880
  %v882 = vpop.f32.mrb[0].mxu0
  %883 = vmatprep.mubr.f32.mxu0 0.0
  %884 = vmatmul.mubr.f32.gmra.mrb[0].mxu0 %v688
  %v885 = vpop.f32.mrb[0].mxu0
  %v886 = vadd.f32 %v722, %v885
  %v887 = vpop.f32.mrb[0].mxu0
  %888 = vmatprep.mubr.f32.mxu0 0.0
  %889 = vmatmul.mubr.f32.gmra.mrb[0].mxu0 %v689
  %v890 = vpop.f32.mrb[0].mxu0
  %v891 = vadd.f32 %v722, %v890
  %v892 = vpop.f32.mrb[0].mxu0
  %893 = vmatprep.mubr.f32.mxu0 0.0
  %894 = vmatmul.mubr.f32.gmra.mrb[0].mxu0 %v690
  %v895 = vpop.f32.mrb[0].mxu0
  %v896 = vadd.f32 %v722, %v895
  %v897 = vpop.f32.mrb[0].mxu0
  %898 = vmatprep.mubr.f32.mxu0 0.0
  %899 = vmatmul.mubr.f32.gmra.mrb[0].mxu0 %v691
  %v900 = vpop.f32.mrb[0].mxu0
  %v901 = vadd.f32 %v722, %v900
  %v902 = vpop.f32.mrb[0].mxu0
  %903 = vmatprep.mubr.f32.mxu0 0.0
  %904 = vmatmul.mubr.f32.gmra.mrb[0].mxu0 %v692
  %v905 = vpop.f32.mrb[0].mxu0
  %v906 = vadd.f32 %v722, %v905
  %v907 = vpop.f32.mrb[0].mxu0
  %908 = vmatprep.mubr.f32.mxu0 0.0
  %909 = vmatmul.mubr.f32.gmra.mrb[0].mxu0 %v693
  %v910 = vpop.f32.mrb[0].mxu0
  %v911 = vadd.f32 %v722, %v910
  %v912 = vpop.f32.mrb[0].mxu0
  %913 = vmatprep.mubr.f32.mxu0 0.0
  %914 = vmatmul.mubr.f32.gmra.mrb[0].mxu0 %v694
  %v915 = vpop.f32.mrb[0].mxu0
  %v916 = vadd.f32 %v722, %v915
  %v917 = vpop.f32.mrb[0].mxu0
  %918 = vmatprep.mubr.f32.mxu0 0.0
  %919 = vmatmul.mubr.f32.gmra.mrb[0].mxu0 %v695
  %v920 = vpop.f32.mrb[0].mxu0
  %v921 = vadd.f32 %v722, %v920
  %v922 = vpop.f32.mrb[0].mxu0
  %923 = vmatprep.mubr.f32.mxu0 0.0
  %924 = vmatmul.mubr.f32.gmra.mrb[0].mxu0 %v696
  %v925 = vpop.f32.mrb[0].mxu0
  %v926 = vadd.f32 %v722, %v925
  %v927 = vpop.f32.mrb[0].mxu0
  %928 = vmatprep.mubr.f32.mxu0 0.0
  %929 = vmatmul.mubr.f32.gmra.mrb[0].mxu0 %v697
  %v930 = vpop.f32.mrb[0].mxu0
  %v931 = vadd.f32 %v722, %v930
  %v932 = vpop.f32.mrb[0].mxu0
  %933 = vmatprep.mubr.f32.mxu0 0.0
  %934 = vmatmul.mubr.f32.gmra.mrb[0].mxu0 %v698
  %v935 = vpop.f32.mrb[0].mxu0
  %v936 = vadd.f32 %v722, %v935
  %v937 = vpop.f32.mrb[0].mxu0
  %938 = vmatprep.mubr.f32.mxu0 0.0
  %939 = vmatmul.mubr.f32.gmra.mrb[0].mxu0 %v699
  %v940 = vpop.f32.mrb[0].mxu0
  %v941 = vadd.f32 %v722, %v940
  %v942 = vpop.f32.mrb[0].mxu0
  %943 = vmatprep.mubr.f32.mxu0 0.0
  %944 = vmatmul.mubr.f32.gmra.mrb[0].mxu0 %v700
  %v945 = vpop.f32.mrb[0].mxu0
  %v946 = vadd.f32 %v722, %v945
  %v947 = vpop.f32.mrb[0].mxu0
  %948 = vdwg.mxu0
  %949 = vst [vmem:[%s7] sm:$0xff] %v791
  %950 = vst [vmem:[%s7 + $0x8] sm:$0xff] %v796
  %951 = vst [vmem:[%s7 + $0x10] sm:$0xff] %v801
  %952 = vst [vmem:[%s7 + $0x18] sm:$0xff] %v806
  %953 = vst [vmem:[%s7 + $0x20] sm:$0xff] %v811
  %954 = vst [vmem:[%s7 + $0x28] sm:$0xff] %v816
  %955 = vst [vmem:[%s7 + $0x30] sm:$0xff] %v821
  %956 = vst [vmem:[%s7 + $0x38] sm:$0xff] %v826
  %957 = vst [vmem:[%s7 + $0x40] sm:$0xff] %v831
  %958 = vst [vmem:[%s7 + $0x48] sm:$0xff] %v836
  %959 = vst [vmem:[%s7 + $0x50] sm:$0xff] %v841
  %960 = vst [vmem:[%s7 + $0x58] sm:$0xff] %v846
  %961 = vst [vmem:[%s7 + $0x60] sm:$0xff] %v851
  %962 = vst [vmem:[%s7 + $0x68] sm:$0xff] %v856
  %963 = vst [vmem:[%s7 + $0x70] sm:$0xff] %v861
  %964 = vst [vmem:[%s7 + $0x78] sm:$0xff] %v866
  %965 = vst [vmem:[%s7 + $0x80] sm:$0xff] %v871
  %966 = vst [vmem:[%s7 + $0x88] sm:$0xff] %v876
  %967 = vst [vmem:[%s7 + $0x90] sm:$0xff] %v881
  %968 = vst [vmem:[%s7 + $0x98] sm:$0xff] %v886
  %969 = vst [vmem:[%s7 + $0xa0] sm:$0xff] %v891
  %970 = vst [vmem:[%s7 + $0xa8] sm:$0xff] %v896
  %971 = vst [vmem:[%s7 + $0xb0] sm:$0xff] %v901
  %972 = vst [vmem:[%s7 + $0xb8] sm:$0xff] %v906
  %973 = vst [vmem:[%s7 + $0xc0] sm:$0xff] %v911
  %974 = vst [vmem:[%s7 + $0xc8] sm:$0xff] %v916
  %975 = vst [vmem:[%s7 + $0xd0] sm:$0xff] %v921
  %976 = vst [vmem:[%s7 + $0xd8] sm:$0xff] %v926
  %977 = vst [vmem:[%s7 + $0xe0] sm:$0xff] %v931
  %978 = vst [vmem:[%s7 + $0xe8] sm:$0xff] %v936
  %979 = vst [vmem:[%s7 + $0xf0] sm:$0xff] %v941
  %980 = vst [vmem:[%s7 + $0xf8] sm:$0xff] %v946
  // Predicated region
  $region30: #{dqn_forward.1} parent=0 // pred_check
    _
  $region31: #{dqn_forward.1} parent=0 // pred_check_branch
    %982 = sbr.rel (0) target = $region33
  $region32: #{dqn_forward.1} parent=0 // pred_region
    _
  $region33: #{dqn_forward.1} parent=0 // pred_fallthru
    _
  // Predicated region
  $region34: #{dqn_forward.1} parent=0 // pred_check
    _
  $region35: #{dqn_forward.1} parent=0 // pred_check_branch
    %984 = sbr.rel (0) target = $region37
  $region36: #{dqn_forward.1} parent=0 // pred_region
    _
  $region37: #{dqn_forward.1} parent=0 // pred_fallthru
    _

</llo_original>
